<compile_context>
chip_gen: v7x
topology: tpu7x:2x2x1
jax: 0.10.0
libtpu: 0.0.40
codegen_flags: <defaults>
</compile_context>

<pallas_src>
import jax
import jax.numpy as jnp
from jax.experimental import pallas as pl
from jax.experimental.pallas import tpu as pltpu


def _patch_embed_kernel(x_ref, w_ref, b_ref, o_ref):
    # x_ref: (tm, Kp)  bf16 patch rows (streamed over the grid)
    # w_ref: (Kp, Hp)  bf16 flattened conv weight (VMEM-resident)
    # b_ref: (1, Hp)   f32 bias (VMEM-resident)
    # o_ref: (tm, Hp)  output embeddings
    acc = jnp.dot(x_ref[...], w_ref[...], preferred_element_type=jnp.float32)
    o_ref[...] = (acc + b_ref[...]).astype(o_ref.dtype)


def _round_up(a, b):
    return (a + b - 1) // b * b


def _choose_tm(M, block_m, min_steps=4):
    # Target >= `min_steps` grid steps (feeds both v7x TensorCores, gives the
    # DMA pipeline overlap), but never below 16 rows (bf16 sublane packing)
    # and never above block_m (per-step overhead / VMEM budget).
    tm = _round_up(pl.cdiv(M, min_steps), 16)
    return max(16, min(_round_up(block_m, 16), tm))


def vit_patch_embeddings(pixel_values, conv_weight, conv_bias, patch_size, *,
                         compute_dtype=jnp.bfloat16,
                         out_dtype=jnp.bfloat16,
                         block_m=1024):
    """pixel_values: (B, C, H, W) NCHW
       conv_weight : (hidden, C, P, P)  (PyTorch Conv2d weight layout)
       conv_bias   : (hidden,)
       returns     : (B, num_patches, hidden) in `out_dtype` (must be floating)
    """
    B, C, H, W = pixel_values.shape
    P = patch_size
    hidden = conv_weight.shape[0]
    assert H % P == 0 and W % P == 0
    assert jnp.issubdtype(jnp.dtype(out_dtype), jnp.floating), \
        "out_dtype must be a float dtype (embeddings are real-valued)"
    nh, nw = H // P, W // P
    N = nh * nw
    K = C * P * P
    M = B * N

    # --- glue: patchify NCHW -> (B*N, C*P*P), matching conv-weight (C, P, P)
    # order.  allow_input_fusion below lets XLA fuse this transpose+cast into
    # the kernel's input stream instead of a standalone HBM round-trip.
    x = pixel_values.reshape(B, C, nh, P, nw, P)
    x = jnp.transpose(x, (0, 2, 4, 1, 3, 5)).reshape(M, K)
    w2d = jnp.transpose(conv_weight.reshape(hidden, K))      # (K, hidden)
    b2d = conv_bias.reshape(1, hidden).astype(jnp.float32)

    # bf16 operands, f32 accumulation + bias add inside the kernel.
    x = x.astype(compute_dtype)
    w2d = w2d.astype(compute_dtype)

    # --- lane alignment (zeros do not change the dot).  Typical ViT shapes
    # (K = 3*16*16 = 768, hidden = 768/1024/1280) need no padding at all.
    Kp = _round_up(K, 128)
    Hp = _round_up(hidden, 128)
    if Kp != K:
        x = jnp.pad(x, ((0, 0), (0, Kp - K)))
        w2d = jnp.pad(w2d, ((0, Kp - K), (0, 0)))
    if Hp != hidden:
        w2d = jnp.pad(w2d, ((0, 0), (0, Hp - hidden)))
        b2d = jnp.pad(b2d, ((0, 0), (0, Hp - hidden)))

    # --- row tiling: no M-axis padding; Pallas masks the ragged last block
    # (OOB reads only affect OOB output rows, whose writes are dropped).
    tm = _choose_tm(M, block_m)
    grid = (pl.cdiv(M, tm),)

    in_itemsize = jnp.dtype(compute_dtype).itemsize
    out_itemsize = jnp.dtype(out_dtype).itemsize
    cost = pl.CostEstimate(
        flops=2 * M * Kp * Hp,
        transcendentals=0,
        bytes_accessed=(M * Kp * in_itemsize
                        + Kp * Hp * in_itemsize
                        + M * Hp * out_itemsize),
    )

    out = pl.pallas_call(
        _patch_embed_kernel,
        out_shape=jax.ShapeDtypeStruct((M, Hp), out_dtype),
        grid=grid,
        in_specs=[
            pl.BlockSpec((tm, Kp), lambda i: (i, 0)),   # patch rows: streamed
            pl.BlockSpec((Kp, Hp), lambda i: (0, 0)),   # weight: resident
            pl.BlockSpec((1, Hp), lambda i: (0, 0)),    # bias: resident
        ],
        out_specs=pl.BlockSpec((tm, Hp), lambda i: (i, 0)),
        compiler_params=pltpu.CompilerParams(
            dimension_semantics=("parallel",),
            allow_input_fusion=[True, False, False],
        ),
        cost_estimate=cost,
    )(x, w2d, b2d)

    if Hp != hidden:
        out = out[:, :hidden]
    return out.reshape(B, N, hidden)


if __name__ == "__main__":
    # Small shapes consistent with a ViT patch embedding:
    #   batch=2, channels=3, image=16x16, patch=4 -> 16 patches, hidden=32
    B, C, Himg, Wimg, P, HIDDEN = 2, 3, 16, 16, 4, 32

    key = jax.random.PRNGKey(0)
    k_x, k_w, k_b = jax.random.split(key, 3)
    pixel_values = jax.random.normal(k_x, (B, C, Himg, Wimg), dtype=jnp.float32)
    conv_weight = 0.02 * jax.random.normal(k_w, (HIDDEN, C, P, P), dtype=jnp.float32)
    conv_bias = 0.01 * jax.random.normal(k_b, (HIDDEN,), dtype=jnp.float32)

    emb = vit_patch_embeddings(pixel_values, conv_weight, conv_bias, P)
    emb = jax.block_until_ready(emb)

    # Reference in plain JAX f32 (same patchify + matmul semantics as the conv).
    nh, nw = Himg // P, Wimg // P
    xr = pixel_values.reshape(B, C, nh, P, nw, P)
    xr = jnp.transpose(xr, (0, 2, 4, 1, 3, 5)).reshape(B * nh * nw, C * P * P)
    ref = (xr @ conv_weight.reshape(HIDDEN, -1).T + conv_bias).reshape(B, nh * nw, HIDDEN)

    assert emb.shape == (B, nh * nw, HIDDEN)
    # bf16 operands/output with f32 accumulation -> loosened tolerance vs f32 ref.
    err = float(jnp.max(jnp.abs(emb.astype(jnp.float32) - ref)))
    assert jnp.allclose(emb.astype(jnp.float32), ref, atol=2e-2, rtol=2e-2), err

    print("KERNEL_OK")
</pallas_src>

<mosaic_0001>
module attributes {stable_mosaic.version = 11 : i64} {
  func.func @_patch_embed_kernel(%arg0: i32, %arg1: memref<16x128xbf16, #tpu.memory_space<vmem>>, %arg2: memref<128x128xbf16, #tpu.memory_space<vmem>>, %arg3: memref<1x128xf32, #tpu.memory_space<vmem>>, %arg4: memref<16x128xbf16, #tpu.memory_space<vmem>>) attributes {dimension_semantics = [#tpu.dimension_semantics<parallel>], iteration_bounds = array<i64: 2>, scalar_prefetch = 0 : i64, scratch_operands = 0 : i64, tpu.core_type = #tpu.core_type<tc>, window_params = [{transform_indices = @transform_0, window_bounds = array<i64: 16, 128>}, {pipeline_mode = #tpu.pipeline_mode<synchronous>, transform_indices = @transform_1, window_bounds = array<i64: 128, 128>}, {pipeline_mode = #tpu.pipeline_mode<synchronous>, transform_indices = @transform_2, window_bounds = array<i64: 1, 128>}, {transform_indices = @transform_3, window_bounds = array<i64: 16, 128>}]} {
    %c0 = arith.constant 0 : index
    %c0_0 = arith.constant 0 : index
    %0 = vector.load %arg1[%c0, %c0_0] : memref<16x128xbf16, #tpu.memory_space<vmem>>, vector<16x128xbf16>
    %c0_1 = arith.constant 0 : index
    %c0_2 = arith.constant 0 : index
    %1 = vector.load %arg2[%c0_1, %c0_2] : memref<128x128xbf16, #tpu.memory_space<vmem>>, vector<128x128xbf16>
    %cst = arith.constant dense<0.000000e+00> : vector<16x128xf32>
    %2 = tpu.matmul %0, %1, %cst {dimension_numbers = #tpu.dot_dimension_numbers<[1], [0], [0], [1], [0, 0, 1, 1], [], []>} : vector<16x128xbf16>, vector<128x128xbf16>, vector<16x128xf32> -> vector<16x128xf32>
    %c0_3 = arith.constant 0 : index
    %c0_4 = arith.constant 0 : index
    %3 = vector.load %arg3[%c0_3, %c0_4] : memref<1x128xf32, #tpu.memory_space<vmem>>, vector<1x128xf32>
    %4 = vector.broadcast %3 : vector<1x128xf32> to vector<16x128xf32>
    %5 = arith.addf %2, %4 : vector<16x128xf32>
    %6 = arith.truncf %5 : vector<16x128xf32> to vector<16x128xbf16>
    %c0_5 = arith.constant 0 : index
    %c0_6 = arith.constant 0 : index
    %7 = vector.load %arg4[%c0_5, %c0_6] : memref<16x128xbf16, #tpu.memory_space<vmem>>, vector<16x128xbf16>
    tpu.vector_store %arg4[%c0_5, %c0_6], %6 {strides = array<i32>} : memref<16x128xbf16, #tpu.memory_space<vmem>>, vector<16x128xbf16>,
    return
  }
  func.func @transform_0(%arg0: i32) -> (i32, i32) {
    %c0_i32 = arith.constant 0 : i32
    %c0_i32_0 = arith.constant 0 : i32
    return %arg0, %c0_i32 : i32, i32
  }
  func.func @transform_1(%arg0: i32) -> (i32, i32) {
    %c0_i32 = arith.constant 0 : i32
    %c0_i32_0 = arith.constant 0 : i32
    %c0_i32_1 = arith.constant 0 : i32
    return %c0_i32, %c0_i32_0 : i32, i32
  }
  func.func @transform_2(%arg0: i32) -> (i32, i32) {
    %c0_i32 = arith.constant 0 : i32
    %c0_i32_0 = arith.constant 0 : i32
    %c0_i32_1 = arith.constant 0 : i32
    return %c0_i32, %c0_i32_0 : i32, i32
  }
  func.func @transform_3(%arg0: i32) -> (i32, i32) {
    %c0_i32 = arith.constant 0 : i32
    %c0_i32_0 = arith.constant 0 : i32
    return %arg0, %c0_i32 : i32, i32
  }
}

</mosaic_0001>

<llo_original>
// kernel: tpu_custom_call.1
$region0: #{tpu_custom_call.1}
  #allocation0 [shape = 'u32[]', space=smem, size = 0x4, offset = 0x4, fixed_abs, tag = 'smem constant byte address 0x4 - core index']
  #allocation1 [shape = 'u32[144,128]{1,0:T(1,128)}', space=vmem, size = 0x12000, scoped, tag = 'internal scratch']
  %s0 = inlined_call_operand.hbm [shape: bf16[32,128], index: 0, kind: input, shape index: {}]
  %s1 = inlined_call_operand.hbm [shape: bf16[128,128], index: 1, kind: input, shape index: {}]
  %s2 = inlined_call_operand.vmem [shape: f32[1,128], index: 2, kind: input, shape index: {}]
  %s3 = inlined_call_operand.hbm [shape: bf16[32,128], index: 3, kind: output, shape index: {}]
  %s4 = sld [smem:[#allocation0]]
  $region53: #{tpu_custom_call.1} parent=0
    _
  %s6 = ssub.s32 1, %s4
  %s7 = scalar_select 0, %s6, %s4
  $region1: #{tpu_custom_call.1} parent=0
    #allocation2 [shape = 'u8[8192]{0}', space=vmem, size = 0x2000, scoped, tag = 'input window, operand 0']
    #allocation3 [shape = 's32[2]{0}', space=sflag, size = 0x8, scoped, tag = 'scoped memory for tpu_custom_call.1']
    #allocation4 [shape = 's32[2]{0}', space=sflag, size = 0x8, scoped, tag = 'scoped memory for tpu_custom_call.1']
    #allocation5 [shape = 'u8[32768]{0}', space=vmem, size = 0x8000, scoped, tag = 'input window, operand 1, single buffered']
    #allocation6 [shape = 's32[1]{0}', space=sflag, size = 0x4, scoped, tag = 'scoped memory for tpu_custom_call.1']
    #allocation7 [shape = 'u8[8192]{0}', space=vmem, size = 0x2000, scoped, tag = 'output window, operand 0']
    %8 = vsyncpa [#allocation3], 0
    %s9 = scalar_lea.sflag [#allocation3], 1
    %10 = vsyncpa %s9, 0
    %11 = vsyncpa [#allocation6], 0
    %12 = vsyncpa [#allocation4], 0
    %s13 = scalar_lea.sflag [#allocation4], 1
    %14 = vsyncpa %s13, 0
    loop: start=0, step=1, limit=4
    $region2: #{tpu_custom_call.1} parent=1 // loop_pre_header
      _
    $region3: #{tpu_custom_call.1} parent=1 // loop_header
      %s16 = sphi 0, %s20
      %p17 = scmp.ge.s32.totalorder %s16, 4
      %s26 = sphi 0, %s28
      %s29 = sphi 0, %s26
      %s30 = sphi 0, %s29
      %s46 = sphi 0, %s30
      %s50 = sphi 0, %s50
      %s52 = sphi 0, %s50
      %s53 = sphi 0, %s52
      %s67 = sphi 0, %s53
      %s71 = sphi 0, %s71
      %s73 = sphi 0, %s71
      %s74 = sphi 0, %s73
      %s88 = sphi 0, %s74
      %s94 = sphi 0, %s96
      %s97 = sphi 0, %s94
      %s98 = sphi 0, %s97
      %s114 = sphi 0, %s98
    $region4: #{tpu_custom_call.1} parent=1 // loop_header_branch
      %19 = sbr.rel (%p17) target = $region8
    $region5: #{tpu_custom_call.1} parent=1 // loop_body
      %s21 = ssub.s32 %s16, 1
      %s22 = ssub.s32 %s16, 2
      %s23 = sadd.s32 %s16, 1
      %s24 = ssub.s32 %s16, %s23
      %p25 = scmp.eq.s32.totalorder %s24, 0
      %s27 = sadd.s32 %s26, 1
      %s28 = scalar_select %p25, %s26, %s27
      %p31 = pneg %p25
      %p32 = scmp.eq.s32.totalorder %s16, 1
      %p33 = por %p31, %p32
      %p34 = scmp.ne.s32.totalorder %s26, %s29
      %p35 = scmp.eq.s32.totalorder %s16, 0
      %p36 = por %p34, %p35
      %p37 = scmp.ne.s32.totalorder %s26, %s29
      %p38 = scmp.eq.s32.totalorder %s21, 1
      %p39 = por %p37, %p38
      %p40 = scmp.ne.s32.totalorder %s29, %s30
      %p41 = scmp.eq.s32.totalorder %s21, 0
      %p42 = por %p40, %p41
      %p43 = scmp.ne.s32.totalorder %s29, %s30
      %p44 = scmp.eq.s32.totalorder %s22, 1
      %p45 = por %p43, %p44
      %p47 = scmp.ne.s32.totalorder %s30, %s46
      %p48 = scmp.eq.s32.totalorder %s22, 0
      %p49 = por %p47, %p48
      %s51 = sadd.s32 %s50, 1
      %p54 = scmp.eq.s32.totalorder %s16, 1
      %p55 = scmp.ne.s32.totalorder %s50, %s52
      %p56 = scmp.eq.s32.totalorder %s16, 0
      %p57 = por %p55, %p56
      %p58 = scmp.ne.s32.totalorder %s50, %s52
      %p59 = scmp.eq.s32.totalorder %s21, 1
      %p60 = por %p58, %p59
      %p61 = scmp.ne.s32.totalorder %s52, %s53
      %p62 = scmp.eq.s32.totalorder %s21, 0
      %p63 = por %p61, %p62
      %p64 = scmp.ne.s32.totalorder %s52, %s53
      %p65 = scmp.eq.s32.totalorder %s22, 1
      %p66 = por %p64, %p65
      %p68 = scmp.ne.s32.totalorder %s53, %s67
      %p69 = scmp.eq.s32.totalorder %s22, 0
      %p70 = por %p68, %p69
      %s72 = sadd.s32 %s71, 1
      %p75 = scmp.eq.s32.totalorder %s16, 1
      %p76 = scmp.ne.s32.totalorder %s71, %s73
      %p77 = scmp.eq.s32.totalorder %s16, 0
      %p78 = por %p76, %p77
      %p79 = scmp.ne.s32.totalorder %s71, %s73
      %p80 = scmp.eq.s32.totalorder %s21, 1
      %p81 = por %p79, %p80
      %p82 = scmp.ne.s32.totalorder %s73, %s74
      %p83 = scmp.eq.s32.totalorder %s21, 0
      %p84 = por %p82, %p83
      %p85 = scmp.ne.s32.totalorder %s73, %s74
      %p86 = scmp.eq.s32.totalorder %s22, 1
      %p87 = por %p85, %p86
      %p89 = scmp.ne.s32.totalorder %s74, %s88
      %p90 = scmp.eq.s32.totalorder %s22, 0
      %p91 = por %p89, %p90
      %s92 = ssub.s32 %s16, %s23
      %p93 = scmp.eq.s32.totalorder %s92, 0
      %s95 = sadd.s32 %s94, 1
      %s96 = scalar_select %p93, %s94, %s95
      %p99 = pneg %p93
      %p100 = scmp.eq.s32.totalorder %s16, 1
      %p101 = por %p99, %p100
      %p102 = scmp.ne.s32.totalorder %s94, %s97
      %p103 = scmp.eq.s32.totalorder %s16, 0
      %p104 = por %p102, %p103
      %p105 = scmp.ne.s32.totalorder %s94, %s97
      %p106 = scmp.eq.s32.totalorder %s21, 1
      %p107 = por %p105, %p106
      %p108 = scmp.ne.s32.totalorder %s97, %s98
      %p109 = scmp.eq.s32.totalorder %s21, 0
      %p110 = por %p108, %p109
      %p111 = scmp.ne.s32.totalorder %s97, %s98
      %p112 = scmp.eq.s32.totalorder %s22, 1
      %p113 = por %p111, %p112
      %p115 = scmp.ne.s32.totalorder %s98, %s114
      %p116 = scmp.eq.s32.totalorder %s22, 0
      %p117 = por %p115, %p116
      %p118 = scmp.le.s32.totalorder 1, %s16
      %p119 = scmp.lt.s32.totalorder %s16, 3
      %p120 = pnand %p118, %p119
      %p121 = pneg %p120
      // Predicated region
      $region9: #{tpu_custom_call.1} parent=5 // pred_check
        _
      $region10: #{tpu_custom_call.1} parent=5 // pred_check_branch
        %123 = sbr.rel (%p120) target = $region12
      $region11: #{tpu_custom_call.1} parent=5 // pred_region
        %s124 = ssub.s32 %s16, 1
        // Predicated region
        $region13: #{tpu_custom_call.1} parent=11 // pred_check
          %p125 = pneg %p63
        $region14: #{tpu_custom_call.1} parent=11 // pred_check_branch
          %127 = sbr.rel (%p125) target = $region16
        $region15: #{tpu_custom_call.1} parent=11 // pred_region
          %s129 = ssub.s32 1024, 1024
          %130 = vsyncadd [#allocation6], %s129
          %s131 = sshll.u32 [#allocation5], 4
          %s132 = int_to_ptr.vmem [resolvable:$true] %s131
          %137 = dma.hbm_to_vmem [thread:$0]  %s1, 1024, %s132, [#allocation6], 64, 64, 4
        $region16: #{tpu_custom_call.1} parent=11 // pred_fallthru
          _
        // Predicated region
        $region17: #{tpu_custom_call.1} parent=11 // pred_check
          %p138 = pneg %p84
        $region18: #{tpu_custom_call.1} parent=11 // pred_check_branch
          %140 = sbr.rel (%p138) target = $region20
        $region19: #{tpu_custom_call.1} parent=11 // pred_region
          _
        $region20: #{tpu_custom_call.1} parent=11 // pred_fallthru
          _
      $region12: #{tpu_custom_call.1} parent=5 // pred_fallthru
        _
      %p141 = scmp.lt.s32.totalorder %s16, 2
      // Predicated region
      $region21: #{tpu_custom_call.1} parent=5 // pred_check
        %p142 = pneg %p141
      $region22: #{tpu_custom_call.1} parent=5 // pred_check_branch
        %144 = sbr.rel (%p142) target = $region24
      $region23: #{tpu_custom_call.1} parent=5 // pred_region
        // Predicated region
        $region25: #{tpu_custom_call.1} parent=23 // pred_check
          %p145 = pneg %p36
        $region26: #{tpu_custom_call.1} parent=23 // pred_check_branch
          %147 = sbr.rel (%p145) target = $region28
        $region27: #{tpu_custom_call.1} parent=23 // pred_region
          %s148 = sand.u32 %s26, 1
          %s149 = scalar_lea.sflag [#allocation3], %s148
          %s150 = sand.u32 %s26, 1
          %s151 = smul.addr %s150, 8
          %s152 = scalar_lea.vmem [#allocation2], %s151
          %s153 = smul.u32 2, %s16
          %s155 = ssub.s32 128, 128
          %156 = vsyncadd %s149, %s155
          %s157 = smul.addr %s153, 64
          %s158 = scalar_lea.hbm %s0, %s157
          %s159 = sshll.u32 %s152, 4
          %s160 = int_to_ptr.vmem [resolvable:$true] %s159
          %165 = dma.hbm_to_vmem [thread:$0]  %s158, 128, %s160, %s149, 64, 64, 4
        $region28: #{tpu_custom_call.1} parent=23 // pred_fallthru
          _
      $region24: #{tpu_custom_call.1} parent=5 // pred_fallthru
        _
      %p166 = scmp.le.s32.totalorder 1, %s16
      %p167 = scmp.lt.s32.totalorder %s16, 3
      %p168 = pnand %p166, %p167
      %p169 = pneg %p168
      // Predicated region
      $region29: #{tpu_custom_call.1} parent=5 // pred_check
        _
      $region30: #{tpu_custom_call.1} parent=5 // pred_check_branch
        %171 = sbr.rel (%p168) target = $region32
      $region31: #{tpu_custom_call.1} parent=5 // pred_region
        %s172 = ssub.s32 %s16, 1
        %s173 = sand.u32 %s29, 1
        %s174 = scalar_lea.sflag [#allocation3], %s173
        %s175 = sand.u32 %s29, 1
        %s176 = smul.addr %s175, 8
        %s177 = scalar_lea.vmem [#allocation2], %s176
        // Predicated region
        $region33: #{tpu_custom_call.1} parent=31 // pred_check
          %p178 = pneg %p42
        $region34: #{tpu_custom_call.1} parent=31 // pred_check_branch
          %180 = sbr.rel (%p178) target = $region36
        $region35: #{tpu_custom_call.1} parent=31 // pred_region
          %181 = dma.done %s174, 128
        $region36: #{tpu_custom_call.1} parent=31 // pred_fallthru
          _
        // Predicated region
        $region37: #{tpu_custom_call.1} parent=31 // pred_check
          %p182 = pneg %p63
        $region38: #{tpu_custom_call.1} parent=31 // pred_check_branch
          %184 = sbr.rel (%p182) target = $region40
        $region39: #{tpu_custom_call.1} parent=31 // pred_region
          %185 = dma.done [#allocation6], 1024
        $region40: #{tpu_custom_call.1} parent=31 // pred_fallthru
          _
        %s186 = sand.u32 %s29, 1
        %s187 = scalar_lea.sflag [#allocation3], %s186
        %s188 = sand.u32 %s29, 1
        %s189 = smul.addr %s188, 8
        %s190 = scalar_lea.vmem [#allocation2], %s189
        %p191 = pneg %p42
        %p192 = pneg %p39
        %p193 = pneg %p63
        %p194 = pneg %p60
        %p195 = pneg %p84
        %p196 = pneg %p81
        %p197 = pneg %p110
        %p198 = pneg %p107
        %s199 = sand.u32 %s97, 1
        %s200 = scalar_lea.sflag [#allocation4], %s199
        %s201 = sand.u32 %s97, 1
        %s202 = smul.addr %s201, 8
        %s203 = scalar_lea.vmem [#allocation7], %s202
        %s204 = smul.u32 2, %s21
        %s205 = smul.u32 2, %s21
        %v207 = vld [vmem:[%s177] sm:$0xf]
        %v208 = vld [vmem:[%s177 + $0x4] sm:$0xf]
        %v209 = vld [vmem:[#allocation5] sm:$0xf]
        %v210 = vld [vmem:[#allocation5 + $0x4] sm:$0xf]
        %v211 = vld [vmem:[#allocation5 + $0x8] sm:$0xf]
        %v212 = vld [vmem:[#allocation5 + $0xc] sm:$0xf]
        %v213 = vld [vmem:[#allocation5 + $0x10] sm:$0xf]
        %v214 = vld [vmem:[#allocation5 + $0x14] sm:$0xf]
        %v215 = vld [vmem:[#allocation5 + $0x18] sm:$0xf]
        %v216 = vld [vmem:[#allocation5 + $0x1c] sm:$0xf]
        %v217 = vld [vmem:[#allocation5 + $0x20] sm:$0xf]
        %v218 = vld [vmem:[#allocation5 + $0x24] sm:$0xf]
        %v219 = vld [vmem:[#allocation5 + $0x28] sm:$0xf]
        %v220 = vld [vmem:[#allocation5 + $0x2c] sm:$0xf]
        %v221 = vld [vmem:[#allocation5 + $0x30] sm:$0xf]
        %v222 = vld [vmem:[#allocation5 + $0x34] sm:$0xf]
        %v223 = vld [vmem:[#allocation5 + $0x38] sm:$0xf]
        %v224 = vld [vmem:[#allocation5 + $0x3c] sm:$0xf]
        %v225 = vld [vmem:[%s2] sm:$0x1]
        %v227 = vlaneseq
        %v228 = vshrl.u32 %v227, 7
        %v229 = vsub.s32 0, %v228
        %v230 = vrot.slane %v225, %v229
        %v234 = vunpack.c.l.b16 %v207
        %v235 = vunpack.c.l.b16 %v208
        %v236 = vpack.c.b16 %v235, %v234
        %v254 = vunpack.c.l.b16 %v209
        %v255 = vunpack.c.l.b16 %v210
        %v256 = vunpack.c.l.b16 %v211
        %v257 = vunpack.c.l.b16 %v212
        %v258 = vunpack.c.l.b16 %v213
        %v259 = vunpack.c.l.b16 %v214
        %v260 = vunpack.c.l.b16 %v215
        %v261 = vunpack.c.l.b16 %v216
        %v262 = vunpack.c.l.b16 %v217
        %v263 = vunpack.c.l.b16 %v218
        %v264 = vunpack.c.l.b16 %v219
        %v265 = vunpack.c.l.b16 %v220
        %v266 = vunpack.c.l.b16 %v221
        %v267 = vunpack.c.l.b16 %v222
        %v268 = vunpack.c.l.b16 %v223
        %v269 = vunpack.c.l.b16 %v224
        %v270 = vpack.c.b16 %v255, %v254
        %v271 = vpack.c.b16 %v257, %v256
        %v272 = vpack.c.b16 %v259, %v258
        %v273 = vpack.c.b16 %v261, %v260
        %v274 = vpack.c.b16 %v263, %v262
        %v275 = vpack.c.b16 %v265, %v264
        %v276 = vpack.c.b16 %v267, %v266
        %v277 = vpack.c.b16 %v269, %v268
        %286 = vmatprep.subr.bf16.mxu0 0
        %287 = vmatpush1.bf16.msra.mxu0 %v270
        %288 = vmatprep.subr.bf16.mxu0 0
        %289 = vmatpush1.bf16.msra.mxu0 %v271
        %290 = vmatprep.subr.bf16.mxu0 0
        %291 = vmatpush1.bf16.msra.mxu0 %v272
        %292 = vmatprep.subr.bf16.mxu0 0
        %293 = vmatpush1.bf16.msra.mxu0 %v273
        %294 = vmatprep.subr.bf16.mxu0 0
        %295 = vmatpush1.bf16.msra.mxu0 %v274
        %296 = vmatprep.subr.bf16.mxu0 0
        %297 = vmatpush1.bf16.msra.mxu0 %v275
        %298 = vmatprep.subr.bf16.mxu0 0
        %299 = vmatpush1.bf16.msra.mxu0 %v276
        %300 = vmatprep.subr.bf16.mxu0 0
        %301 = vmatpush1.bf16.msra.mxu0 %v277
        %302 = vmatprep.subr.bf16.mxu0 0
        %303 = vmatpush1.bf16.msra.mxu0 0
        %304 = vmatprep.subr.bf16.mxu0 0
        %305 = vmatpush1.bf16.msra.mxu0 0
        %306 = vmatprep.subr.bf16.mxu0 0
        %307 = vmatpush1.bf16.msra.mxu0 0
        %308 = vmatprep.subr.bf16.mxu0 0
        %309 = vmatpush1.bf16.msra.mxu0 0
        %310 = vmatprep.subr.bf16.mxu0 0
        %311 = vmatpush1.bf16.msra.mxu0 0
        %312 = vmatprep.subr.bf16.mxu0 0
        %313 = vmatpush1.bf16.msra.mxu0 0
        %314 = vmatprep.subr.bf16.mxu0 0
        %315 = vmatpush1.bf16.msra.mxu0 0
        %316 = vmatprep.subr.bf16.mxu0 0
        %317 = vmatpush1.bf16.msra.mxu0 0
        %318 = vmatprep.mubr.bf16.mxu0 0
        %319 = vmatmul.mubr.bf16.gmra.mrb[0].mxu0 %v236
        %v320 = vpop.f32.mrb[0].mxu0
        %v321 = vadd.f32 %v230, %v320
        %v322 = vpop.f32.mrb[0].mxu0
        %v323 = vpop.f32.mrb[0].mxu0
        %v324 = vadd.f32 %v230, %v323
        %v325 = vpop.f32.mrb[0].mxu0
        %326 = vdwg.mxu0
        %v327 = vpack.c.bf16 %v324, %v321
        %v329 = vunpack.c.l.b16 %v327
        %v330 = vunpack.c.h.b16 %v327
        %v331 = vpack.c.b16 %v329, %v329
        %v332 = vpack.c.b16 %v330, %v330
        %335 = vst [vmem:[%s203] sm:$0xf] %v331
        %336 = vst [vmem:[%s203 + $0x4] sm:$0xf] %v332
        %s337 = sand.u32 %s97, 1
        %s338 = scalar_lea.sflag [#allocation4], %s337
        %s339 = sand.u32 %s97, 1
        %s340 = smul.addr %s339, 8
        %s341 = scalar_lea.vmem [#allocation7], %s340
        // Predicated region
        $region41: #{tpu_custom_call.1} parent=31 // pred_check
          %p342 = pneg %p107
        $region42: #{tpu_custom_call.1} parent=31 // pred_check_branch
          %344 = sbr.rel (%p342) target = $region44
        $region43: #{tpu_custom_call.1} parent=31 // pred_region
          %s345 = smul.u32 2, %s21
          %s347 = ssub.s32 128, 128
          %348 = vsyncadd %s338, %s347
          %s349 = smul.addr %s345, 64
          %s350 = scalar_lea.hbm %s3, %s349
          %s351 = sshll.u32 %s341, 4
          %s352 = int_to_ptr.vmem [resolvable:$true] %s351
          %357 = dma.vmem_to_hbm [thread:$0]  %s352, 128, %s350, %s338, 64, 64, 4
        $region44: #{tpu_custom_call.1} parent=31 // pred_fallthru
          _
      $region32: #{tpu_custom_call.1} parent=5 // pred_fallthru
        _
      %p358 = scmp.le.s32.totalorder 2, %s16
      // Predicated region
      $region45: #{tpu_custom_call.1} parent=5 // pred_check
        %p359 = pneg %p358
      $region46: #{tpu_custom_call.1} parent=5 // pred_check_branch
        %361 = sbr.rel (%p359) target = $region48
      $region47: #{tpu_custom_call.1} parent=5 // pred_region
        %s362 = ssub.s32 %s16, 2
        // Predicated region
        $region49: #{tpu_custom_call.1} parent=47 // pred_check
          %p363 = pneg %p113
        $region50: #{tpu_custom_call.1} parent=47 // pred_check_branch
          %365 = sbr.rel (%p363) target = $region52
        $region51: #{tpu_custom_call.1} parent=47 // pred_region
          %s366 = sand.u32 %s98, 1
          %s367 = scalar_lea.sflag [#allocation4], %s366
          %s368 = sand.u32 %s98, 1
          %s369 = smul.addr %s368, 8
          %s370 = scalar_lea.vmem [#allocation7], %s369
          %371 = dma.done %s367, 128
        $region52: #{tpu_custom_call.1} parent=47 // pred_fallthru
          _
      $region48: #{tpu_custom_call.1} parent=5 // pred_fallthru
        _
    $region6: #{tpu_custom_call.1} parent=1 // loop_footer
      %s20 = sadd.s32 1, %s16
    $region7: #{tpu_custom_call.1} parent=1 // loop_footer_branch
      %15 = sbr.rel target = $region3
    $region8: #{tpu_custom_call.1} parent=1 // loop_exit
      _
    %372 = vsyncpa [#allocation3], 1
    %s373 = scalar_lea.sflag [#allocation3], 1
    %374 = vsyncpa %s373, 1
    %375 = vsyncpa [#allocation6], 1
    %376 = vsyncpa [#allocation4], 1
    %s377 = scalar_lea.sflag [#allocation4], 1
    %378 = vsyncpa %s377, 1

</llo_original>
